<compile_context>
chip_gen: v7x
topology: tpu7x:2x2x1
jax: 0.10.0
libtpu: 0.0.40
codegen_flags: <defaults>
</compile_context>

<pallas_src>
import jax
import jax.numpy as jnp
from jax import lax
from jax.experimental import pallas as pl
from jax.experimental.pallas import tpu as pltpu


def _model2d_kernel(a_ref, b_ref, o_ref):
    # a_ref: (100, 128) f32  im2col of the channel-summed 100x100 weight image
    #                        rows = conv output position (i*10+j), cols = kh*10+kw (zero-padded)
    # b_ref: (1, 128)   f32  flattened 10x10 x tile (zero-padded)
    # o_ref: (1, 3)     f32  softmax prediction
    a = a_ref[...]
    b = b_ref[...]

    # conv2d(weight, x_rep, stride=10): one dot product per output position, on the MXU.
    # (1,128) . (100,128)^T -> (1,100), lane-dense; zero-padded K columns contribute 0.
    conv = lax.dot_general(
        b, a,
        dimension_numbers=(((1,), (1,)), ((), ())),
        preferred_element_type=jnp.float32,
    )                                                        # (1, 100)

    # sigmoid (exp on EUP; exact torch.sigmoid math for this value range)
    sig = 1.0 / (1.0 + jnp.exp(-conv))                       # (1, 100)

    # sum over spatial dims [2,3]
    s = jnp.sum(sig, axis=1, keepdims=True)                  # (1, 1)

    # repeat(3,3,1,1) makes the 3 output-channel filters identical -> identical sums
    sums = jnp.broadcast_to(s, (1, 3))                       # (1, 3)

    # softmax over channel dim (dim=1); identical inputs -> exactly 1/3 each
    m = jnp.max(sums, axis=1, keepdims=True)
    e = jnp.exp(sums - m)
    o_ref[...] = e / jnp.sum(e, axis=1, keepdims=True)


@jax.jit
def model2d_forward(x, weight):
    """x: any 100-element tensor (here (1,1,10,10)); weight: (1,3,100,100). Returns (1,3)."""
    xk = x.reshape(10, 10).astype(jnp.float32)

    # Pre-sum the 3 input channels (the conv filter is the same x tile for every channel).
    w_sum = jnp.sum(weight.astype(jnp.float32)[0], axis=0)   # (100, 100)

    # im2col: A[i*10+j, kh*10+kw] = w_sum[10*i+kh, 10*j+kw]
    w4 = w_sum.reshape(10, 10, 10, 10)                       # (i, kh, j, kw)
    a = jnp.transpose(w4, (0, 2, 1, 3)).reshape(100, 100)    # (i*10+j, kh*10+kw)

    # Zero-pad the reduction (lane) dim 100 -> 128: unmasked vregs, clean MXU K.
    a = jnp.pad(a, ((0, 0), (0, 28)))                        # (100, 128)
    b = jnp.pad(xk.reshape(1, 100), ((0, 0), (0, 28)))       # (1, 128)

    out = pl.pallas_call(
        _model2d_kernel,
        out_shape=jax.ShapeDtypeStruct((1, 3), jnp.float32),
        in_specs=[
            pl.BlockSpec(memory_space=pltpu.MemorySpace.VMEM),
            pl.BlockSpec(memory_space=pltpu.MemorySpace.VMEM),
        ],
        out_specs=pl.BlockSpec(memory_space=pltpu.MemorySpace.VMEM),
    )(a, b)
    return out


def _reference(x, weight):
    """Pure-JAX reference of the PyTorch forward."""
    xk = x.reshape(10, 10)
    w5 = weight.reshape(3, 10, 10, 10, 10)                   # (c, i, kh, j, kw)
    conv = jnp.einsum('cihjw,hw->ij', w5, xk)                # (10,10), same for each out channel
    sig = jax.nn.sigmoid(conv)
    s = jnp.sum(sig)
    sums = jnp.full((1, 3), s, jnp.float32)
    return jax.nn.softmax(sums, axis=1)


if __name__ == "__main__":
    key = jax.random.PRNGKey(0)
    k_w, k_x = jax.random.split(key)

    # Parameter: torch.randn(1,3,100,100) + kaiming_normal_ (fan_in=3*100*100, gain=sqrt(2))
    fan_in = 3 * 100 * 100
    std = (2.0 / fan_in) ** 0.5
    weight = jax.random.normal(k_w, (1, 3, 100, 100), dtype=jnp.float32) * std

    # Input: 100 elements, viewed to (1,1,10,10) inside forward
    x = jax.random.normal(k_x, (1, 1, 10, 10), dtype=jnp.float32)

    out = jax.block_until_ready(model2d_forward(x, weight))
    ref = _reference(x, weight)

    assert out.shape == (1, 3) and out.dtype == jnp.float32
    assert bool(jnp.allclose(out, ref, atol=1e-5)), (out, ref)
    print("KERNEL_OK")
</pallas_src>

<mosaic_0001>
module attributes {stable_mosaic.version = 11 : i64} {
  func.func @_model2d_kernel(%arg0: memref<100x128xf32, #tpu.memory_space<vmem>>, %arg1: memref<1x128xf32, #tpu.memory_space<vmem>>, %arg2: memref<1x3xf32, #tpu.memory_space<vmem>>) attributes {dimension_semantics = [], scalar_prefetch = 0 : i64, scratch_operands = 0 : i64, tpu.core_type = #tpu.core_type<tc>} {
    %c0 = arith.constant 0 : index
    %c0_0 = arith.constant 0 : index
    %0 = vector.load %arg0[%c0, %c0_0] : memref<100x128xf32, #tpu.memory_space<vmem>>, vector<100x128xf32>
    %c0_1 = arith.constant 0 : index
    %c0_2 = arith.constant 0 : index
    %1 = vector.load %arg1[%c0_1, %c0_2] : memref<1x128xf32, #tpu.memory_space<vmem>>, vector<1x128xf32>
    %cst = arith.constant dense<0.000000e+00> : vector<1x100xf32>
    %2 = tpu.matmul %1, %0, %cst {dimension_numbers = #tpu.dot_dimension_numbers<[1], [1], [0], [0], [0, 0, 1, 0], [], []>} : vector<1x128xf32>, vector<100x128xf32>, vector<1x100xf32> -> vector<1x100xf32>
    %cst_3 = arith.constant 0.000000e+00 : f32
    %3 = vector.broadcast %cst_3 : f32 to vector<1x100xf32>
    %4 = arith.subf %3, %2 : vector<1x100xf32>
    %5 = math.exp %4 : vector<1x100xf32>
    %cst_4 = arith.constant 1.000000e+00 : f32
    %6 = vector.broadcast %cst_4 : f32 to vector<1x100xf32>
    %7 = arith.addf %6, %5 : vector<1x100xf32>
    %cst_5 = arith.constant 1.000000e+00 : f32
    %8 = vector.broadcast %cst_5 : f32 to vector<1x100xf32>
    %9 = arith.divf %8, %7 : vector<1x100xf32>
    %cst_6 = arith.constant dense<0.000000e+00> : vector<1xf32>
    %10 = vector.multi_reduction <add>, %9, %cst_6 [1] : vector<1x100xf32> to vector<1xf32>
    %11 = vector.shape_cast %10 : vector<1xf32> to vector<1x1xf32>
    %12 = vector.shape_cast %11 : vector<1x1xf32> to vector<1x1xf32>
    %13 = vector.broadcast %12 : vector<1x1xf32> to vector<1x3xf32>
    %cst_7 = arith.constant dense<0xFF800000> : vector<1xf32>
    %14 = vector.multi_reduction <maximumf>, %13, %cst_7 [1] : vector<1x3xf32> to vector<1xf32>
    %15 = vector.shape_cast %14 : vector<1xf32> to vector<1x1xf32>
    %16 = vector.broadcast %15 : vector<1x1xf32> to vector<1x3xf32>
    %17 = arith.subf %13, %16 : vector<1x3xf32>
    %18 = math.exp %17 : vector<1x3xf32>
    %cst_8 = arith.constant dense<0.000000e+00> : vector<1xf32>
    %19 = vector.multi_reduction <add>, %18, %cst_8 [1] : vector<1x3xf32> to vector<1xf32>
    %20 = vector.shape_cast %19 : vector<1xf32> to vector<1x1xf32>
    %21 = vector.broadcast %20 : vector<1x1xf32> to vector<1x3xf32>
    %22 = arith.divf %18, %21 : vector<1x3xf32>
    %c0_9 = arith.constant 0 : index
    %c0_10 = arith.constant 0 : index
    %23 = vector.load %arg2[%c0_9, %c0_10] : memref<1x3xf32, #tpu.memory_space<vmem>>, vector<1x3xf32>
    tpu.vector_store %arg2[%c0_9, %c0_10], %22 {strides = array<i32>} : memref<1x3xf32, #tpu.memory_space<vmem>>, vector<1x3xf32>,
    return
  }
}

</mosaic_0001>

<llo_original>
// kernel: model2d_forward.1
$region0: #{model2d_forward.1}
  #allocation0 [shape = 'u32[]', space=smem, size = 0x4, offset = 0x4, fixed_abs, tag = 'smem constant byte address 0x4 - core index']
  #allocation1 [shape = 'u32[144,128]{1,0:T(1,128)}', space=vmem, size = 0x12000, scoped, tag = 'internal scratch']
  %s0 = inlined_call_operand.vmem [shape: f32[100,128], index: 0, kind: input, shape index: {}]
  %s1 = inlined_call_operand.vmem [shape: f32[1,128], index: 1, kind: input, shape index: {}]
  %s2 = inlined_call_operand.hbm [shape: f32[1,3], index: 2, kind: output, shape index: {}]
  %s3 = sld [smem:[#allocation0]]
  $region18: #{model2d_forward.1} parent=0
    _
  %s5 = ssub.s32 1, %s3
  %s6 = scalar_select 0, %s5, %s3
  $region1: #{model2d_forward.1} parent=0
    #allocation2 [shape = 'u8[512]{0}', space=vmem, size = 0x400, scoped, tag = 'output window, operand 0, single buffered']
    #allocation3 [shape = 's32[1]{0}', space=sflag, size = 0x4, scoped, tag = 'scoped memory for model2d_forward.1']
    %7 = vsyncpa [#allocation3], 0
    // Predicated region
    $region2: #{model2d_forward.1} parent=1 // pred_check
      _
    $region3: #{model2d_forward.1} parent=1 // pred_check_branch
      %9 = sbr.rel (0) target = $region5
    $region4: #{model2d_forward.1} parent=1 // pred_region
      _
    $region5: #{model2d_forward.1} parent=1 // pred_fallthru
      _
    // Predicated region
    $region6: #{model2d_forward.1} parent=1 // pred_check
      _
    $region7: #{model2d_forward.1} parent=1 // pred_check_branch
      %11 = sbr.rel (0) target = $region9
    $region8: #{model2d_forward.1} parent=1 // pred_region
      _
    $region9: #{model2d_forward.1} parent=1 // pred_fallthru
      _
    %v12 = vld [vmem:[%s0] sm:$0xff]
    %v13 = vld [vmem:[%s0 + $0x8] sm:$0xff]
    %v14 = vld [vmem:[%s0 + $0x10] sm:$0xff]
    %v15 = vld [vmem:[%s0 + $0x18] sm:$0xff]
    %v16 = vld [vmem:[%s0 + $0x20] sm:$0xff]
    %v17 = vld [vmem:[%s0 + $0x28] sm:$0xff]
    %v18 = vld [vmem:[%s0 + $0x30] sm:$0xff]
    %v19 = vld [vmem:[%s0 + $0x38] sm:$0xff]
    %v20 = vld [vmem:[%s0 + $0x40] sm:$0xff]
    %v21 = vld [vmem:[%s0 + $0x48] sm:$0xff]
    %v22 = vld [vmem:[%s0 + $0x50] sm:$0xff]
    %v23 = vld [vmem:[%s0 + $0x58] sm:$0xff]
    %v24 = vld [vmem:[%s0 + $0x60] sm:$0xf]
    %v25 = vld [vmem:[%s1] sm:$0x1]
    %26 = vmatprep.subr.mxu0 0.0
    %27 = vmatpush1.xpose.msra.mxu0 %v12
    %28 = vmatprep.subr.mxu0 0.0
    %29 = vmatpush1.xpose.msra.mxu0 %v13
    %30 = vmatprep.subr.mxu0 0.0
    %31 = vmatpush1.xpose.msra.mxu0 %v14
    %32 = vmatprep.subr.mxu0 0.0
    %33 = vmatpush1.xpose.msra.mxu0 %v15
    %34 = vmatprep.subr.mxu0 0.0
    %35 = vmatpush1.xpose.msra.mxu0 %v16
    %36 = vmatprep.subr.mxu0 0.0
    %37 = vmatpush1.xpose.msra.mxu0 %v17
    %38 = vmatprep.subr.mxu0 0.0
    %39 = vmatpush1.xpose.msra.mxu0 %v18
    %40 = vmatprep.subr.mxu0 0.0
    %41 = vmatpush1.xpose.msra.mxu0 %v19
    %42 = vmatprep.subr.mxu0 0.0
    %43 = vmatpush1.xpose.msra.mxu0 %v20
    %44 = vmatprep.subr.mxu0 0.0
    %45 = vmatpush1.xpose.msra.mxu0 %v21
    %46 = vmatprep.subr.mxu0 0.0
    %47 = vmatpush1.xpose.msra.mxu0 %v22
    %48 = vmatprep.subr.mxu0 0.0
    %49 = vmatpush1.xpose.msra.mxu0 %v23
    %50 = vmatprep.subr.mxu0 0.0
    %51 = vmatpush1.xpose.msra.mxu0 %v24
    %52 = vmatprep.subr.mxu0 0.0
    %53 = vmatpush1.xpose.msra.mxu0 0.0
    %54 = vmatprep.subr.mxu0 0.0
    %55 = vmatpush1.xpose.msra.mxu0 0.0
    %56 = vmatprep.subr.mxu0 0.0
    %57 = vmatpush1.xpose.msra.mxu0 0.0
    %58 = vmatprep.subr.mxu0 0.0
    %59 = vmatpush1.xpose.msra.mxu0 0.0
    %60 = vmatprep.subr.mxu0 0.0
    %61 = vmatpush1.xpose.msra.mxu0 0.0
    %62 = vmatprep.subr.mxu0 0.0
    %63 = vmatpush1.xpose.msra.mxu0 0.0
    %64 = vmatprep.subr.mxu0 0.0
    %65 = vmatpush1.xpose.msra.mxu0 0.0
    %66 = vmatprep.subr.mxu0 0.0
    %67 = vmatpush1.xpose.msra.mxu0 0.0
    %68 = vmatprep.subr.mxu0 0.0
    %69 = vmatpush1.xpose.msra.mxu0 0.0
    %70 = vmatprep.subr.mxu0 0.0
    %71 = vmatpush1.xpose.msra.mxu0 0.0
    %72 = vmatprep.subr.mxu0 0.0
    %73 = vmatpush1.xpose.msra.mxu0 0.0
    %74 = vmatprep.subr.mxu0 0.0
    %75 = vmatpush1.xpose.msra.mxu0 0.0
    %76 = vmatprep.subr.mxu0 0.0
    %77 = vmatpush1.xpose.msra.mxu0 0.0
    %78 = vmatprep.subr.mxu0 0.0
    %79 = vmatpush1.xpose.msra.mxu0 0.0
    %80 = vmatprep.subr.mxu0 0.0
    %81 = vmatpush1.xpose.msra.mxu0 0.0
    %82 = vmatprep.subr.mxu0 0.0
    %83 = vmatpush1.xpose.msra.mxu0 0.0
    %84 = vmatprep.subr.mxu0 0.0
    %85 = vmatpush1.xpose.msra.mxu0 0.0
    %86 = vmatprep.subr.mxu0 0.0
    %87 = vmatpush1.xpose.msra.mxu0 0.0
    %88 = vmatprep.subr.mxu0 0.0
    %89 = vmatpush1.xpose.msra.mxu0 0.0
    %90 = vmatprep.mubr.f32.mxu0 0.0
    %91 = vmatmul.mubr.f32.gmra.mrb[0].mxu0 %v25
    %v92 = vpop.f32.mrb[0].mxu0
    %v93 = vadd.f32 0.0, %v92
    %v94 = vpop.f32.mrb[0].mxu0
    %95 = vdwg.mxu0
    %v96 = vsub.f32 0.0, %v93
    %v97 = vmul.f32 %v96, 1.442695
    %v98 = vpow.pop %v97
    %v99 = vadd.f32 %v98, 1.0
    %v100 = vrcp.pop %v99
    %v101 = vmul.f32 1.0, %v100
    %vm102 = vcmask 811008
    %v103 = vsel %vm102, %v101, 0.0
    %104 = vadd.xlane.f32.xlu0 %v103
    %v105 = vpop.xlane.xlu0 %104
    %vm106 = vcmask 1040384
    %v107 = vsel %vm106, %v105, -inf
    %v108 = vsub.f32 %v105, %v107
    %v109 = vmul.f32 %v108, 1.442695
    %v110 = vpow.pop %v109
    %vm111 = vcmask 16384
    %v112 = vsel %vm111, %v110, 0.0
    %113 = vadd.xlane.f32.xlu0 %v112
    %v114 = vpop.xlane.xlu0 %113
    %v115 = vrcp.pop %v114
    %v116 = vmul.f32 %v110, %v115
    %117 = vst.msk [vmem:[#allocation2] sm:$0x1] %vm111, %v116
    // Predicated region
    $region10: #{model2d_forward.1} parent=1 // pred_check
      _
    $region11: #{model2d_forward.1} parent=1 // pred_check_branch
      %119 = sbr.rel (0) target = $region13
    $region12: #{model2d_forward.1} parent=1 // pred_region
      %s121 = ssub.s32 16, 16
      %122 = vsyncadd [#allocation3], %s121
      %s124 = sshll.u32 [#allocation2], 4
      %s125 = int_to_ptr.vmem [resolvable:$true] %s124
      %127 = dma.vmem_to_hbm [thread:$0]  %s125, 16, %s2, [#allocation3]
    $region13: #{model2d_forward.1} parent=1 // pred_fallthru
      _
    // Predicated region
    $region14: #{model2d_forward.1} parent=1 // pred_check
      _
    $region15: #{model2d_forward.1} parent=1 // pred_check_branch
      %129 = sbr.rel (0) target = $region17
    $region16: #{model2d_forward.1} parent=1 // pred_region
      %130 = dma.done [#allocation3], 16
    $region17: #{model2d_forward.1} parent=1 // pred_fallthru
      _
    %131 = vsyncpa [#allocation3], 1

</llo_original>
